<compile_context>
chip_gen: v5e
topology: v5e:2x2
jax: 0.10.0
libtpu: 0.0.40
codegen_flags: <defaults>
</compile_context>

<pallas_src>
import jax
import jax.numpy as jnp
from jax.experimental import pallas as pl
from jax.experimental.pallas import tpu as pltpu

HIDDEN = 256


def _round_up(a, m):
    return ((a + m - 1) // m) * m


def critic_kernel(x_ref, w1_ref, b1_ref, w2_ref, b2_ref, w3_ref, b3_ref, out_ref):
    # fc1 + relu : bf16 MXU matmul, f32 accumulation, f32 elementwise.
    x_bf = x_ref[...].astype(jnp.bfloat16)
    h1 = jnp.dot(x_bf, w1_ref[...], preferred_element_type=jnp.float32)
    h1 = jnp.maximum(h1 + b1_ref[...], 0.0)

    # fc2 + relu (dominant FLOPs: 256x256).
    h2 = jnp.dot(h1.astype(jnp.bfloat16), w2_ref[...],
                 preferred_element_type=jnp.float32)
    h2 = jnp.maximum(h2 + b2_ref[...], 0.0)

    # fc3 : VPU multiply + lane reduction instead of a 1-column MXU matmul.
    w3_row = w3_ref[...].astype(jnp.float32)            # (1, 256)
    q = jnp.sum(h2 * w3_row, axis=-1, keepdims=True)    # (TB, 1)

    # Lane-dense store: relayout (TB,1) -> (1,TB) on the otherwise-idle XLU so
    # the VMEM->HBM writeback is one contiguous TB*4-byte row, not TB masked
    # 1-lane stores.  Scalar bias comes from SMEM.
    out_ref[...] = q.T + b3_ref[0, 0]                   # (1, TB)


def critic_forward(x, params, *, batch_tile=2048):
    """x: (B, state_dim) f32.  params from init_critic_params.  Returns (B, 1) f32."""
    w1, b1, w2, b2, w3, b3 = params
    B, state_dim = x.shape

    if B <= 512:
        # Single tile; batch too small for a v7x two-core split to matter.
        TB = B
    else:
        # >= 2 grid steps so "parallel" can shard batch tiles across the two
        # v7x TensorCores, capped at batch_tile (VMEM use is ~3 KB f32 per row).
        TB = min(batch_tile, _round_up(pl.cdiv(B, 2), 8))
    num_tiles = pl.cdiv(B, TB)

    def resident(shape):
        # Weight / bias block identical for every grid step -> VMEM-resident,
        # its DMA amortized across all batch tiles.
        return pl.BlockSpec(shape, lambda i: (0, 0))

    bpe = {jnp.dtype(jnp.bfloat16): 2, jnp.dtype(jnp.float32): 4}
    bytes_accessed = (
        B * state_dim * 4                       # x (f32)
        + sum(int(a.size) * bpe[jnp.dtype(a.dtype)] for a in (w1, b1, w2, b2, w3, b3))
        + num_tiles * TB * 4                    # output rows
    )
    cost = pl.CostEstimate(
        flops=2 * B * (state_dim * HIDDEN + HIDDEN * HIDDEN + HIDDEN),
        transcendentals=0,
        bytes_accessed=int(bytes_accessed),
    )

    out_tiles = pl.pallas_call(
        critic_kernel,
        out_shape=jax.ShapeDtypeStruct((num_tiles, TB), jnp.float32),
        grid=(num_tiles,),
        in_specs=[
            pl.BlockSpec((TB, state_dim), lambda i: (i, 0)),     # x batch tile
            resident((state_dim, HIDDEN)),                       # w1 (bf16)
            resident((1, HIDDEN)),                               # b1 (f32)
            resident((HIDDEN, HIDDEN)),                          # w2 (bf16)
            resident((1, HIDDEN)),                               # b2 (f32)
            resident((1, HIDDEN)),                               # w3 row (bf16)
            pl.BlockSpec(memory_space=pltpu.MemorySpace.SMEM),   # b3 scalar
        ],
        out_specs=pl.BlockSpec((1, TB), lambda i: (i, 0)),       # lane-dense rows
        compiler_params=pltpu.CompilerParams(
            dimension_semantics=("parallel",),    # shard batch tiles across TCs (v7x)
            vmem_limit_bytes=32 * 1024 * 1024,    # well above the ~7 MiB footprint at TB=2048
        ),
        cost_estimate=cost,
    )(x, w1, b1, w2, b2, w3, b3)

    # (num_tiles, TB) row-major == batch order; drop ragged-tail garbage rows.
    return out_tiles.reshape(num_tiles * TB)[:B].reshape(B, 1)


def init_critic_params(key, state_dim, hidden=HIDDEN):
    """PyTorch nn.Linear-style init U[-1/sqrt(fan_in), 1/sqrt(fan_in)].
    Weights stored bf16 (x @ W layout); biases f32."""
    ks = jax.random.split(key, 6)

    def linear(kw, kb, fan_in, fan_out):
        bound = 1.0 / jnp.sqrt(jnp.float32(fan_in))
        w = jax.random.uniform(kw, (fan_in, fan_out), jnp.float32, -bound, bound)
        b = jax.random.uniform(kb, (1, fan_out), jnp.float32, -bound, bound)
        return w.astype(jnp.bfloat16), b

    w1, b1 = linear(ks[0], ks[1], state_dim, hidden)
    w2, b2 = linear(ks[2], ks[3], hidden, hidden)
    w3_col, b3 = linear(ks[4], ks[5], hidden, 1)
    w3 = w3_col.reshape(1, hidden)   # store head weights as a (1, 256) row
    b3 = b3.reshape(1, 1)            # scalar bias, lives in SMEM inside the kernel
    return (w1, b1, w2, b2, w3, b3)


def critic_reference(x, params):
    """Pure-JAX reference replicating the kernel's bf16-weight numerics."""
    w1, b1, w2, b2, w3, b3 = params
    hp = jax.lax.Precision.HIGHEST
    xb = x.astype(jnp.bfloat16).astype(jnp.float32)
    h1 = jnp.maximum(jnp.dot(xb, w1.astype(jnp.float32), precision=hp) + b1, 0.0)
    h1b = h1.astype(jnp.bfloat16).astype(jnp.float32)
    h2 = jnp.maximum(jnp.dot(h1b, w2.astype(jnp.float32), precision=hp) + b2, 0.0)
    return jnp.sum(h2 * w3.astype(jnp.float32), axis=-1, keepdims=True) + b3[0, 0]


if __name__ == "__main__":
    STATE_DIM = 32   # state dimension

    key = jax.random.PRNGKey(0)
    kx, kp, kx2 = jax.random.split(key, 3)
    params = init_critic_params(kp, STATE_DIM)

    # Primary small-shape check (single tile path).
    B = 8
    x = jax.random.normal(kx, (B, STATE_DIM), jnp.float32)
    out = jax.block_until_ready(critic_forward(x, params))
    ref = critic_reference(x, params)
    assert out.shape == (B, 1), out.shape
    assert jnp.allclose(out, ref, atol=1e-2, rtol=1e-2), "mismatch vs reference (B=8)"

    # Secondary check: multi-tile path (2 grid steps, lane-dense output rows).
    B2 = 1024
    x2 = jax.random.normal(kx2, (B2, STATE_DIM), jnp.float32)
    out2 = jax.block_until_ready(critic_forward(x2, params))
    ref2 = critic_reference(x2, params)
    assert out2.shape == (B2, 1), out2.shape
    assert jnp.allclose(out2, ref2, atol=1e-2, rtol=1e-2), "mismatch vs reference (B=1024)"

    print("KERNEL_OK")
</pallas_src>

<mosaic_0001>
module attributes {stable_mosaic.version = 11 : i64} {
  func.func @critic_kernel(%arg0: i32, %arg1: memref<8x32xf32, #tpu.memory_space<vmem>>, %arg2: memref<32x256xbf16, #tpu.memory_space<vmem>>, %arg3: memref<1x256xf32, #tpu.memory_space<vmem>>, %arg4: memref<256x256xbf16, #tpu.memory_space<vmem>>, %arg5: memref<1x256xf32, #tpu.memory_space<vmem>>, %arg6: memref<1x256xbf16, #tpu.memory_space<vmem>>, %arg7: memref<1x1xf32, #tpu.memory_space<smem>>, %arg8: memref<1x8xf32, #tpu.memory_space<vmem>>) attributes {dimension_semantics = [#tpu.dimension_semantics<parallel>], iteration_bounds = array<i64: 1>, scalar_prefetch = 0 : i64, scratch_operands = 0 : i64, tpu.core_type = #tpu.core_type<tc>, window_params = [{transform_indices = @transform_0, window_bounds = array<i64: 8, 32>}, {pipeline_mode = #tpu.pipeline_mode<synchronous>, transform_indices = @transform_1, window_bounds = array<i64: 32, 256>}, {pipeline_mode = #tpu.pipeline_mode<synchronous>, transform_indices = @transform_2, window_bounds = array<i64: 1, 256>}, {pipeline_mode = #tpu.pipeline_mode<synchronous>, transform_indices = @transform_3, window_bounds = array<i64: 256, 256>}, {pipeline_mode = #tpu.pipeline_mode<synchronous>, transform_indices = @transform_4, window_bounds = array<i64: 1, 256>}, {pipeline_mode = #tpu.pipeline_mode<synchronous>, transform_indices = @transform_5, window_bounds = array<i64: 1, 256>}, {transform_indices = @transform_6, window_bounds = array<i64: 1, 1>}, {transform_indices = @transform_7, window_bounds = array<i64: 1, 8>}]} {
    %c0 = arith.constant 0 : index
    %c0_0 = arith.constant 0 : index
    %0 = vector.load %arg1[%c0, %c0_0] : memref<8x32xf32, #tpu.memory_space<vmem>>, vector<8x32xf32>
    %1 = arith.truncf %0 : vector<8x32xf32> to vector<8x32xbf16>
    %c0_1 = arith.constant 0 : index
    %c0_2 = arith.constant 0 : index
    %2 = vector.load %arg2[%c0_1, %c0_2] : memref<32x256xbf16, #tpu.memory_space<vmem>>, vector<32x256xbf16>
    %cst = arith.constant dense<0.000000e+00> : vector<8x256xf32>
    %3 = tpu.matmul %1, %2, %cst {dimension_numbers = #tpu.dot_dimension_numbers<[1], [0], [0], [1], [0, 0, 1, 1], [], []>} : vector<8x32xbf16>, vector<32x256xbf16>, vector<8x256xf32> -> vector<8x256xf32>
    %c0_3 = arith.constant 0 : index
    %c0_4 = arith.constant 0 : index
    %4 = vector.load %arg3[%c0_3, %c0_4] : memref<1x256xf32, #tpu.memory_space<vmem>>, vector<1x256xf32>
    %5 = vector.broadcast %4 : vector<1x256xf32> to vector<8x256xf32>
    %6 = arith.addf %3, %5 : vector<8x256xf32>
    %cst_5 = arith.constant 0.000000e+00 : f32
    %7 = vector.broadcast %cst_5 : f32 to vector<8x256xf32>
    %8 = arith.maximumf %6, %7 : vector<8x256xf32>
    %9 = arith.truncf %8 : vector<8x256xf32> to vector<8x256xbf16>
    %c0_6 = arith.constant 0 : index
    %c0_7 = arith.constant 0 : index
    %10 = vector.load %arg4[%c0_6, %c0_7] : memref<256x256xbf16, #tpu.memory_space<vmem>>, vector<256x256xbf16>
    %cst_8 = arith.constant dense<0.000000e+00> : vector<8x256xf32>
    %11 = tpu.matmul %9, %10, %cst_8 {dimension_numbers = #tpu.dot_dimension_numbers<[1], [0], [0], [1], [0, 0, 1, 1], [], []>} : vector<8x256xbf16>, vector<256x256xbf16>, vector<8x256xf32> -> vector<8x256xf32>
    %c0_9 = arith.constant 0 : index
    %c0_10 = arith.constant 0 : index
    %12 = vector.load %arg5[%c0_9, %c0_10] : memref<1x256xf32, #tpu.memory_space<vmem>>, vector<1x256xf32>
    %13 = vector.broadcast %12 : vector<1x256xf32> to vector<8x256xf32>
    %14 = arith.addf %11, %13 : vector<8x256xf32>
    %cst_11 = arith.constant 0.000000e+00 : f32
    %15 = vector.broadcast %cst_11 : f32 to vector<8x256xf32>
    %16 = arith.maximumf %14, %15 : vector<8x256xf32>
    %c0_12 = arith.constant 0 : index
    %c0_13 = arith.constant 0 : index
    %17 = vector.load %arg6[%c0_12, %c0_13] : memref<1x256xbf16, #tpu.memory_space<vmem>>, vector<1x256xbf16>
    %18 = arith.extf %17 : vector<1x256xbf16> to vector<1x256xf32>
    %19 = vector.broadcast %18 : vector<1x256xf32> to vector<8x256xf32>
    %20 = arith.mulf %16, %19 : vector<8x256xf32>
    %cst_14 = arith.constant dense<0.000000e+00> : vector<8xf32>
    %21 = vector.multi_reduction <add>, %20, %cst_14 [1] : vector<8x256xf32> to vector<8xf32>
    %22 = vector.shape_cast %21 : vector<8xf32> to vector<8x1xf32>
    %23 = tpu.transpose %22, [1, 0] : vector<8x1xf32> -> vector<1x8xf32>
    %c0_15 = arith.constant 0 : index
    %c0_16 = arith.constant 0 : index
    %24 = memref.load %arg7[%c0_15, %c0_16] : memref<1x1xf32, #tpu.memory_space<smem>>
    %25 = vector.broadcast %24 : f32 to vector<1x8xf32>
    %26 = arith.addf %23, %25 : vector<1x8xf32>
    %c0_17 = arith.constant 0 : index
    %c0_18 = arith.constant 0 : index
    %27 = vector.load %arg8[%c0_17, %c0_18] : memref<1x8xf32, #tpu.memory_space<vmem>>, vector<1x8xf32>
    tpu.vector_store %arg8[%c0_17, %c0_18], %26 {strides = array<i32>} : memref<1x8xf32, #tpu.memory_space<vmem>>, vector<1x8xf32>,
    return
  }
  func.func @transform_0(%arg0: i32) -> (i32, i32) {
    %c0_i32 = arith.constant 0 : i32
    %c0_i32_0 = arith.constant 0 : i32
    return %arg0, %c0_i32 : i32, i32
  }
  func.func @transform_1(%arg0: i32) -> (i32, i32) {
    %c0_i32 = arith.constant 0 : i32
    %c0_i32_0 = arith.constant 0 : i32
    %c0_i32_1 = arith.constant 0 : i32
    return %c0_i32, %c0_i32_0 : i32, i32
  }
  func.func @transform_2(%arg0: i32) -> (i32, i32) {
    %c0_i32 = arith.constant 0 : i32
    %c0_i32_0 = arith.constant 0 : i32
    %c0_i32_1 = arith.constant 0 : i32
    return %c0_i32, %c0_i32_0 : i32, i32
  }
  func.func @transform_3(%arg0: i32) -> (i32, i32) {
    %c0_i32 = arith.constant 0 : i32
    %c0_i32_0 = arith.constant 0 : i32
    %c0_i32_1 = arith.constant 0 : i32
    return %c0_i32, %c0_i32_0 : i32, i32
  }
  func.func @transform_4(%arg0: i32) -> (i32, i32) {
    %c0_i32 = arith.constant 0 : i32
    %c0_i32_0 = arith.constant 0 : i32
    %c0_i32_1 = arith.constant 0 : i32
    return %c0_i32, %c0_i32_0 : i32, i32
  }
  func.func @transform_5(%arg0: i32) -> (i32, i32) {
    %c0_i32 = arith.constant 0 : i32
    %c0_i32_0 = arith.constant 0 : i32
    %c0_i32_1 = arith.constant 0 : i32
    return %c0_i32, %c0_i32_0 : i32, i32
  }
  func.func @transform_6(%arg0: i32) -> (i32, i32) {
    %c0_i32 = arith.constant 0 : i32
    %c0_i32_0 = arith.constant 0 : i32
    %c0_i32_1 = arith.constant 0 : i32
    return %c0_i32, %c0_i32_0 : i32, i32
  }
  func.func @transform_7(%arg0: i32) -> (i32, i32) {
    %c0_i32 = arith.constant 0 : i32
    %c0_i32_0 = arith.constant 0 : i32
    return %arg0, %c0_i32 : i32, i32
  }
}

</mosaic_0001>

<llo_original>
// kernel: tpu_custom_call.1
$region0: #{tpu_custom_call.1}
  #allocation0 [shape = 'u32[]', space=smem, size = 0x4, offset = 0x4, fixed_abs, tag = 'smem constant byte address 0x4 - core index']
  #allocation1 [shape = 'u32[72,128]{1,0:T(1,128)}', space=vmem, size = 0x9000, scoped, tag = 'internal scratch']
  #allocation2 [shape = 'f32[1,1]{1,0:T(1,128)S(6)}', space=smem, size = 0x200, scoped, tag = 'scoped memory for tpu_custom_call.1']
  %s0 = inlined_call_operand.hbm [shape: f32[8,32], index: 0, kind: input, shape index: {}]
  %s1 = inlined_call_operand.hbm [shape: bf16[32,256], index: 1, kind: input, shape index: {}]
  %s2 = inlined_call_operand.vmem [shape: f32[1,256], index: 2, kind: input, shape index: {}]
  %s3 = inlined_call_operand.hbm [shape: bf16[256,256], index: 3, kind: input, shape index: {}]
  %s4 = inlined_call_operand.vmem [shape: f32[1,256], index: 4, kind: input, shape index: {}]
  %s5 = inlined_call_operand.vmem [shape: bf16[1,256], index: 5, kind: input, shape index: {}]
  %s6 = inlined_call_operand.<no memory space> [shape: f32[1,1], index: 6, kind: input, shape index: {}]
  %s7 = inlined_call_operand.hbm [shape: f32[1,8], index: 7, kind: output, shape index: {}]
  %s8 = sld [smem:[#allocation0]]
  $region50: #{tpu_custom_call.1} parent=0
    _
  %s10 = ssub.s32 1, %s8
  %s11 = scalar_select 0, %s10, %s8
  %12 = sst [smem:[#allocation2]] %s6
  $region1: #{tpu_custom_call.1} parent=0
    #allocation3 [shape = 'u8[4096]{0}', space=vmem, size = 0x1000, scoped, tag = 'input window, operand 0, single buffered']
    #allocation4 [shape = 's32[1]{0}', space=sflag, size = 0x4, scoped, tag = 'scoped memory for tpu_custom_call.1']
    #allocation5 [shape = 's32[1]{0}', space=sflag, size = 0x4, scoped, tag = 'scoped memory for tpu_custom_call.1']
    #allocation6 [shape = 'u8[16384]{0}', space=vmem, size = 0x4000, scoped, tag = 'input window, operand 1, single buffered']
    #allocation7 [shape = 's32[1]{0}', space=sflag, size = 0x4, scoped, tag = 'scoped memory for tpu_custom_call.1']
    #allocation8 [shape = 'u8[131072]{0}', space=vmem, size = 0x20000, scoped, tag = 'input window, operand 3, single buffered']
    #allocation9 [shape = 'u8[512]{0}', space=vmem, size = 0x400, scoped, tag = 'output window, operand 0, single buffered']
    %13 = vsyncpa [#allocation4], 0
    %14 = vsyncpa [#allocation7], 0
    %15 = vsyncpa [#allocation5], 0
    // Predicated region
    $region2: #{tpu_custom_call.1} parent=1 // pred_check
      _
    $region3: #{tpu_custom_call.1} parent=1 // pred_check_branch
      %17 = sbr.rel (0) target = $region5
    $region4: #{tpu_custom_call.1} parent=1 // pred_region
      %19 = vsyncadd [#allocation4], 0
      %s21 = sshll.u32 %s0, 4
      %s22 = int_to_ptr.hbm [resolvable:$true] %s21
      %s23 = sshll.u32 [#allocation3], 4
      %s24 = int_to_ptr.vmem [resolvable:$true] %s23
      %26 = dma.hbm_to_vmem [thread:$0]  %s22, 128, %s24, [#allocation4]
    $region5: #{tpu_custom_call.1} parent=1 // pred_fallthru
      _
    // Predicated region
    $region6: #{tpu_custom_call.1} parent=1 // pred_check
      _
    $region7: #{tpu_custom_call.1} parent=1 // pred_check_branch
      %28 = sbr.rel (0) target = $region9
    $region8: #{tpu_custom_call.1} parent=1 // pred_region
      %30 = vsyncadd [#allocation7], 0
      %s31 = sshll.u32 %s1, 4
      %s32 = int_to_ptr.hbm [resolvable:$true] %s31
      %s33 = sshll.u32 [#allocation6], 4
      %s34 = int_to_ptr.vmem [resolvable:$true] %s33
      %39 = dma.hbm_to_vmem [thread:$0]  %s32, 512, %s34, [#allocation7], 128, 128, 8
    $region9: #{tpu_custom_call.1} parent=1 // pred_fallthru
      _
    // Predicated region
    $region10: #{tpu_custom_call.1} parent=1 // pred_check
      _
    $region11: #{tpu_custom_call.1} parent=1 // pred_check_branch
      %41 = sbr.rel (0) target = $region13
    $region12: #{tpu_custom_call.1} parent=1 // pred_region
      _
    $region13: #{tpu_custom_call.1} parent=1 // pred_fallthru
      _
    // Predicated region
    $region14: #{tpu_custom_call.1} parent=1 // pred_check
      _
    $region15: #{tpu_custom_call.1} parent=1 // pred_check_branch
      %43 = sbr.rel (0) target = $region17
    $region16: #{tpu_custom_call.1} parent=1 // pred_region
      %45 = vsyncadd [#allocation7], 0
      %s46 = sshll.u32 %s3, 4
      %s47 = int_to_ptr.hbm [resolvable:$true] %s46
      %s48 = sshll.u32 [#allocation8], 4
      %s49 = int_to_ptr.vmem [resolvable:$true] %s48
      %54 = dma.hbm_to_vmem [thread:$0]  %s47, 4096, %s49, [#allocation7], 128, 128, 8
    $region17: #{tpu_custom_call.1} parent=1 // pred_fallthru
      _
    // Predicated region
    $region18: #{tpu_custom_call.1} parent=1 // pred_check
      _
    $region19: #{tpu_custom_call.1} parent=1 // pred_check_branch
      %56 = sbr.rel (0) target = $region21
    $region20: #{tpu_custom_call.1} parent=1 // pred_region
      _
    $region21: #{tpu_custom_call.1} parent=1 // pred_fallthru
      _
    // Predicated region
    $region22: #{tpu_custom_call.1} parent=1 // pred_check
      _
    $region23: #{tpu_custom_call.1} parent=1 // pred_check_branch
      %58 = sbr.rel (0) target = $region25
    $region24: #{tpu_custom_call.1} parent=1 // pred_region
      _
    $region25: #{tpu_custom_call.1} parent=1 // pred_fallthru
      _
    // Predicated region
    $region26: #{tpu_custom_call.1} parent=1 // pred_check
      _
    $region27: #{tpu_custom_call.1} parent=1 // pred_check_branch
      %60 = sbr.rel (0) target = $region29
    $region28: #{tpu_custom_call.1} parent=1 // pred_region
      _
    $region29: #{tpu_custom_call.1} parent=1 // pred_fallthru
      _
    // Predicated region
    $region30: #{tpu_custom_call.1} parent=1 // pred_check
      _
    $region31: #{tpu_custom_call.1} parent=1 // pred_check_branch
      %62 = sbr.rel (0) target = $region33
    $region32: #{tpu_custom_call.1} parent=1 // pred_region
      %64 = dma.done [#allocation4], 128
    $region33: #{tpu_custom_call.1} parent=1 // pred_fallthru
      _
    // Predicated region
    $region34: #{tpu_custom_call.1} parent=1 // pred_check
      _
    $region35: #{tpu_custom_call.1} parent=1 // pred_check_branch
      %66 = sbr.rel (0) target = $region37
    $region36: #{tpu_custom_call.1} parent=1 // pred_region
      %68 = dma.done [#allocation7], 512
    $region37: #{tpu_custom_call.1} parent=1 // pred_fallthru
      _
    // Predicated region
    $region38: #{tpu_custom_call.1} parent=1 // pred_check
      _
    $region39: #{tpu_custom_call.1} parent=1 // pred_check_branch
      %70 = sbr.rel (0) target = $region41
    $region40: #{tpu_custom_call.1} parent=1 // pred_region
      %72 = dma.done [#allocation7], 4096
    $region41: #{tpu_custom_call.1} parent=1 // pred_fallthru
      _
    %v74 = vld [vmem:[#allocation3] sm:$0xff]
    %v75 = vpack.c.bf16 %v74, %v74
    %v76 = vld [vmem:[#allocation6] sm:$0xff]
    %v77 = vld [vmem:[#allocation6 + $0x8] sm:$0xff]
    %v78 = vld [vmem:[#allocation6 + $0x10] sm:$0xff]
    %v79 = vld [vmem:[#allocation6 + $0x18] sm:$0xff]
    %v80 = vld [vmem:[%s2] sm:$0x3]
    %v82 = vperm.slane %v80, 0
    %v83 = vperm.slane %v80, 1
    %v90 = vunpack.c.l.b16 %v76
    %v91 = vunpack.c.h.b16 %v76
    %v92 = vunpack.c.l.b16 %v77
    %v93 = vunpack.c.h.b16 %v77
    %v94 = vunpack.c.l.b16 %v78
    %v95 = vunpack.c.h.b16 %v78
    %v96 = vunpack.c.l.b16 %v79
    %v97 = vunpack.c.h.b16 %v79
    %v98 = vpack.c.b16 %v92, %v90
    %v99 = vpack.c.b16 %v93, %v91
    %v100 = vpack.c.b16 %v96, %v94
    %v101 = vpack.c.b16 %v97, %v95
    %vm106 = vcmask 261120
    %v108 = vsel %vm106, %v75, 0
    %110 = vmatpush.bf16.msra.mxu0 0
    %111 = vmatpush.bf16.msra.mxu0 0
    %112 = vmatpush.bf16.msra.mxu0 0
    %113 = vmatpush.bf16.msra.mxu0 0
    %114 = vmatpush.bf16.msra.mxu0 0
    %115 = vmatpush.bf16.msra.mxu0 0
    %116 = vmatpush.bf16.msra.mxu0 %v100
    %117 = vmatpush.bf16.msra.mxu0 %v98
    %118 = vmatmul.bf16.gmra.mxu0 %v108
    %v119 = vpop.f32.mrf.mxu0
    %v120 = vadd.f32 %v82, %v119
    %v121 = vpop.f32.mrf.mxu0
    %122 = vdwg.mxu0
    %123 = vmatpush.bf16.msra.mxu0 0
    %124 = vmatpush.bf16.msra.mxu0 0
    %125 = vmatpush.bf16.msra.mxu0 0
    %126 = vmatpush.bf16.msra.mxu0 0
    %127 = vmatpush.bf16.msra.mxu0 0
    %128 = vmatpush.bf16.msra.mxu0 0
    %129 = vmatpush.bf16.msra.mxu0 %v101
    %130 = vmatpush.bf16.msra.mxu0 %v99
    %131 = vmatmul.bf16.gmra.mxu0 %v108
    %v132 = vpop.f32.mrf.mxu0
    %v133 = vadd.f32 %v83, %v132
    %v134 = vpop.f32.mrf.mxu0
    %135 = vdwg.mxu0
    %v136 = vmax.f32 %v120, 0.0
    %v137 = vmax.f32 %v133, 0.0
    %v138 = vpack.c.bf16 %v136, %v136
    %v139 = vpack.c.bf16 %v137, %v137
    %v140 = vld [vmem:[#allocation8] sm:$0xff]
    %v141 = vld [vmem:[#allocation8 + $0x8] sm:$0xff]
    %v142 = vld [vmem:[#allocation8 + $0x10] sm:$0xff]
    %v143 = vld [vmem:[#allocation8 + $0x18] sm:$0xff]
    %v144 = vld [vmem:[#allocation8 + $0x20] sm:$0xff]
    %v145 = vld [vmem:[#allocation8 + $0x28] sm:$0xff]
    %v146 = vld [vmem:[#allocation8 + $0x30] sm:$0xff]
    %v147 = vld [vmem:[#allocation8 + $0x38] sm:$0xff]
    %v148 = vld [vmem:[#allocation8 + $0x40] sm:$0xff]
    %v149 = vld [vmem:[#allocation8 + $0x48] sm:$0xff]
    %v150 = vld [vmem:[#allocation8 + $0x50] sm:$0xff]
    %v151 = vld [vmem:[#allocation8 + $0x58] sm:$0xff]
    %v152 = vld [vmem:[#allocation8 + $0x60] sm:$0xff]
    %v153 = vld [vmem:[#allocation8 + $0x68] sm:$0xff]
    %v154 = vld [vmem:[#allocation8 + $0x70] sm:$0xff]
    %v155 = vld [vmem:[#allocation8 + $0x78] sm:$0xff]
    %v156 = vld [vmem:[#allocation8 + $0x80] sm:$0xff]
    %v157 = vld [vmem:[#allocation8 + $0x88] sm:$0xff]
    %v158 = vld [vmem:[#allocation8 + $0x90] sm:$0xff]
    %v159 = vld [vmem:[#allocation8 + $0x98] sm:$0xff]
    %v160 = vld [vmem:[#allocation8 + $0xa0] sm:$0xff]
    %v161 = vld [vmem:[#allocation8 + $0xa8] sm:$0xff]
    %v162 = vld [vmem:[#allocation8 + $0xb0] sm:$0xff]
    %v163 = vld [vmem:[#allocation8 + $0xb8] sm:$0xff]
    %v164 = vld [vmem:[#allocation8 + $0xc0] sm:$0xff]
    %v165 = vld [vmem:[#allocation8 + $0xc8] sm:$0xff]
    %v166 = vld [vmem:[#allocation8 + $0xd0] sm:$0xff]
    %v167 = vld [vmem:[#allocation8 + $0xd8] sm:$0xff]
    %v168 = vld [vmem:[#allocation8 + $0xe0] sm:$0xff]
    %v169 = vld [vmem:[#allocation8 + $0xe8] sm:$0xff]
    %v170 = vld [vmem:[#allocation8 + $0xf0] sm:$0xff]
    %v171 = vld [vmem:[#allocation8 + $0xf8] sm:$0xff]
    %v172 = vld [vmem:[%s4] sm:$0x3]
    %v174 = vperm.slane %v172, 0
    %v175 = vperm.slane %v172, 1
    %v210 = vunpack.c.l.b16 %v140
    %v211 = vunpack.c.h.b16 %v140
    %v212 = vunpack.c.l.b16 %v141
    %v213 = vunpack.c.h.b16 %v141
    %v214 = vunpack.c.l.b16 %v142
    %v215 = vunpack.c.h.b16 %v142
    %v216 = vunpack.c.l.b16 %v143
    %v217 = vunpack.c.h.b16 %v143
    %v218 = vunpack.c.l.b16 %v144
    %v219 = vunpack.c.h.b16 %v144
    %v220 = vunpack.c.l.b16 %v145
    %v221 = vunpack.c.h.b16 %v145
    %v222 = vunpack.c.l.b16 %v146
    %v223 = vunpack.c.h.b16 %v146
    %v224 = vunpack.c.l.b16 %v147
    %v225 = vunpack.c.h.b16 %v147
    %v226 = vunpack.c.l.b16 %v148
    %v227 = vunpack.c.h.b16 %v148
    %v228 = vunpack.c.l.b16 %v149
    %v229 = vunpack.c.h.b16 %v149
    %v230 = vunpack.c.l.b16 %v150
    %v231 = vunpack.c.h.b16 %v150
    %v232 = vunpack.c.l.b16 %v151
    %v233 = vunpack.c.h.b16 %v151
    %v234 = vunpack.c.l.b16 %v152
    %v235 = vunpack.c.h.b16 %v152
    %v236 = vunpack.c.l.b16 %v153
    %v237 = vunpack.c.h.b16 %v153
    %v238 = vunpack.c.l.b16 %v154
    %v239 = vunpack.c.h.b16 %v154
    %v240 = vunpack.c.l.b16 %v155
    %v241 = vunpack.c.h.b16 %v155
    %v242 = vunpack.c.l.b16 %v156
    %v243 = vunpack.c.h.b16 %v156
    %v244 = vunpack.c.l.b16 %v157
    %v245 = vunpack.c.h.b16 %v157
    %v246 = vunpack.c.l.b16 %v158
    %v247 = vunpack.c.h.b16 %v158
    %v248 = vunpack.c.l.b16 %v159
    %v249 = vunpack.c.h.b16 %v159
    %v250 = vunpack.c.l.b16 %v160
    %v251 = vunpack.c.h.b16 %v160
    %v252 = vunpack.c.l.b16 %v161
    %v253 = vunpack.c.h.b16 %v161
    %v254 = vunpack.c.l.b16 %v162
    %v255 = vunpack.c.h.b16 %v162
    %v256 = vunpack.c.l.b16 %v163
    %v257 = vunpack.c.h.b16 %v163
    %v258 = vunpack.c.l.b16 %v164
    %v259 = vunpack.c.h.b16 %v164
    %v260 = vunpack.c.l.b16 %v165
    %v261 = vunpack.c.h.b16 %v165
    %v262 = vunpack.c.l.b16 %v166
    %v263 = vunpack.c.h.b16 %v166
    %v264 = vunpack.c.l.b16 %v167
    %v265 = vunpack.c.h.b16 %v167
    %v266 = vunpack.c.l.b16 %v168
    %v267 = vunpack.c.h.b16 %v168
    %v268 = vunpack.c.l.b16 %v169
    %v269 = vunpack.c.h.b16 %v169
    %v270 = vunpack.c.l.b16 %v170
    %v271 = vunpack.c.h.b16 %v170
    %v272 = vunpack.c.l.b16 %v171
    %v273 = vunpack.c.h.b16 %v171
    %v274 = vpack.c.b16 %v212, %v210
    %v275 = vpack.c.b16 %v213, %v211
    %v276 = vpack.c.b16 %v216, %v214
    %v277 = vpack.c.b16 %v217, %v215
    %v278 = vpack.c.b16 %v220, %v218
    %v279 = vpack.c.b16 %v221, %v219
    %v280 = vpack.c.b16 %v224, %v222
    %v281 = vpack.c.b16 %v225, %v223
    %v282 = vpack.c.b16 %v228, %v226
    %v283 = vpack.c.b16 %v229, %v227
    %v284 = vpack.c.b16 %v232, %v230
    %v285 = vpack.c.b16 %v233, %v231
    %v286 = vpack.c.b16 %v236, %v234
    %v287 = vpack.c.b16 %v237, %v235
    %v288 = vpack.c.b16 %v240, %v238
    %v289 = vpack.c.b16 %v241, %v239
    %v290 = vpack.c.b16 %v244, %v242
    %v291 = vpack.c.b16 %v245, %v243
    %v292 = vpack.c.b16 %v248, %v246
    %v293 = vpack.c.b16 %v249, %v247
    %v294 = vpack.c.b16 %v252, %v250
    %v295 = vpack.c.b16 %v253, %v251
    %v296 = vpack.c.b16 %v256, %v254
    %v297 = vpack.c.b16 %v257, %v255
    %v298 = vpack.c.b16 %v260, %v258
    %v299 = vpack.c.b16 %v261, %v259
    %v300 = vpack.c.b16 %v264, %v262
    %v301 = vpack.c.b16 %v265, %v263
    %v302 = vpack.c.b16 %v268, %v266
    %v303 = vpack.c.b16 %v269, %v267
    %v304 = vpack.c.b16 %v272, %v270
    %v305 = vpack.c.b16 %v273, %v271
    %338 = vmatpush.bf16.msra.mxu0 %v288
    %339 = vmatpush.bf16.msra.mxu0 %v286
    %340 = vmatpush.bf16.msra.mxu0 %v284
    %341 = vmatpush.bf16.msra.mxu0 %v282
    %342 = vmatpush.bf16.msra.mxu0 %v280
    %343 = vmatpush.bf16.msra.mxu0 %v278
    %344 = vmatpush.bf16.msra.mxu0 %v276
    %345 = vmatpush.bf16.msra.mxu0 %v274
    %346 = vmatmul.bf16.gmra.mxu0 %v138
    %v347 = vpop.f32.mrf.mxu0
    %v348 = vadd.f32 %v174, %v347
    %v349 = vpop.f32.mrf.mxu0
    %350 = vdwg.mxu0
    %351 = vmatpush.bf16.msra.mxu0 %v304
    %352 = vmatpush.bf16.msra.mxu0 %v302
    %353 = vmatpush.bf16.msra.mxu0 %v300
    %354 = vmatpush.bf16.msra.mxu0 %v298
    %355 = vmatpush.bf16.msra.mxu0 %v296
    %356 = vmatpush.bf16.msra.mxu0 %v294
    %357 = vmatpush.bf16.msra.mxu0 %v292
    %358 = vmatpush.bf16.msra.mxu0 %v290
    %359 = vmatmul.bf16.gmra.mxu0 %v139
    %v360 = vpop.f32.mrf.mxu0
    %v361 = vadd.f32 %v348, %v360
    %v362 = vpop.f32.mrf.mxu0
    %363 = vdwg.mxu0
    %364 = vmatpush.bf16.msra.mxu0 %v289
    %365 = vmatpush.bf16.msra.mxu0 %v287
    %366 = vmatpush.bf16.msra.mxu0 %v285
    %367 = vmatpush.bf16.msra.mxu0 %v283
    %368 = vmatpush.bf16.msra.mxu0 %v281
    %369 = vmatpush.bf16.msra.mxu0 %v279
    %370 = vmatpush.bf16.msra.mxu0 %v277
    %371 = vmatpush.bf16.msra.mxu0 %v275
    %372 = vmatmul.bf16.gmra.mxu0 %v138
    %v373 = vpop.f32.mrf.mxu0
    %v374 = vadd.f32 %v175, %v373
    %v375 = vpop.f32.mrf.mxu0
    %376 = vdwg.mxu0
    %377 = vmatpush.bf16.msra.mxu0 %v305
    %378 = vmatpush.bf16.msra.mxu0 %v303
    %379 = vmatpush.bf16.msra.mxu0 %v301
    %380 = vmatpush.bf16.msra.mxu0 %v299
    %381 = vmatpush.bf16.msra.mxu0 %v297
    %382 = vmatpush.bf16.msra.mxu0 %v295
    %383 = vmatpush.bf16.msra.mxu0 %v293
    %384 = vmatpush.bf16.msra.mxu0 %v291
    %385 = vmatmul.bf16.gmra.mxu0 %v139
    %v386 = vpop.f32.mrf.mxu0
    %v387 = vadd.f32 %v374, %v386
    %v388 = vpop.f32.mrf.mxu0
    %389 = vdwg.mxu0
    %v390 = vmax.f32 %v361, 0.0
    %v391 = vmax.f32 %v387, 0.0
    %v392 = vld [vmem:[%s5] sm:$0x3]
    %v393 = vunpack.c.l.bf16 %v392
    %v395 = vperm.slane %v393, 0
    %v396 = vperm.slane %v393, 2
    %v399 = vperm.slane %v395, 0
    %v400 = vperm.slane %v396, 0
    %v401 = vmul.f32 %v390, %v399
    %v402 = vmul.f32 %v391, %v400
    %v403 = vadd.f32 %v401, %v402
    %404 = vadd.xlane.f32.xlu0 %v403
    %v405 = vpop.xlane.xlu0 %404
    %406 = vxpose.xlu0.b32.start [1/16] %v405, 128
    %407 = vxpose.xlu0.b32.cont [2/16] 0.0, 128
    %408 = vxpose.xlu0.b32.cont [3/16] 0.0, 128
    %409 = vxpose.xlu0.b32.cont [4/16] 0.0, 128
    %410 = vxpose.xlu0.b32.cont [5/16] 0.0, 128
    %411 = vxpose.xlu0.b32.cont [6/16] 0.0, 128
    %412 = vxpose.xlu0.b32.cont [7/16] 0.0, 128
    %413 = vxpose.xlu0.b32.cont [8/16] 0.0, 128
    %414 = vxpose.xlu0.b32.cont [9/16] 0.0, 128
    %415 = vxpose.xlu0.b32.cont [10/16] 0.0, 128
    %416 = vxpose.xlu0.b32.cont [11/16] 0.0, 128
    %417 = vxpose.xlu0.b32.cont [12/16] 0.0, 128
    %418 = vxpose.xlu0.b32.cont [13/16] 0.0, 128
    %419 = vxpose.xlu0.b32.cont [14/16] 0.0, 128
    %420 = vxpose.xlu0.b32.cont [15/16] 0.0, 128
    %421 = vxpose.xlu0.b32.end [16/16] 0.0, 128
    %v422 = vpop.trf.xlu0
    %v423 = vpop.trf.xlu0
    %v424 = vpop.trf.xlu0
    %v425 = vpop.trf.xlu0
    %v426 = vpop.trf.xlu0
    %v427 = vpop.trf.xlu0
    %v428 = vpop.trf.xlu0
    %v429 = vpop.trf.xlu0
    %v430 = vpop.trf.xlu0
    %v431 = vpop.trf.xlu0
    %v432 = vpop.trf.xlu0
    %v433 = vpop.trf.xlu0
    %v434 = vpop.trf.xlu0
    %v435 = vpop.trf.xlu0
    %v436 = vpop.trf.xlu0
    %v437 = vpop.trf.xlu0
    %s438 = sld [smem:[#allocation2]]
    %v439 = vstv %s438
    %v440 = vadd.f32 %v422, %v439
    %vm441 = vcmask 57344
    %442 = vst.msk [vmem:[#allocation9] sm:$0x1] %vm441, %v440
    // Predicated region
    $region42: #{tpu_custom_call.1} parent=1 // pred_check
      _
    $region43: #{tpu_custom_call.1} parent=1 // pred_check_branch
      %444 = sbr.rel (0) target = $region45
    $region44: #{tpu_custom_call.1} parent=1 // pred_region
      %446 = vsyncadd [#allocation5], 0
      %s448 = sshll.u32 [#allocation9], 4
      %s449 = int_to_ptr.vmem [resolvable:$true] %s448
      %s450 = sshll.u32 %s7, 4
      %s451 = int_to_ptr.hbm [resolvable:$true] %s450
      %453 = dma.vmem_to_hbm [thread:$0]  %s449, 16, %s451, [#allocation5]
    $region45: #{tpu_custom_call.1} parent=1 // pred_fallthru
      _
    // Predicated region
    $region46: #{tpu_custom_call.1} parent=1 // pred_check
      _
    $region47: #{tpu_custom_call.1} parent=1 // pred_check_branch
      %455 = sbr.rel (0) target = $region49
    $region48: #{tpu_custom_call.1} parent=1 // pred_region
      %457 = dma.done [#allocation5], 16
    $region49: #{tpu_custom_call.1} parent=1 // pred_fallthru
      _
    %458 = vsyncpa [#allocation4], 1
    %459 = vsyncpa [#allocation7], 1
    %460 = vsyncpa [#allocation5], 1

</llo_original>
